<compile_context>
chip_gen: v5e
topology: v5e:2x2
jax: 0.10.0
libtpu: 0.0.40
codegen_flags: <defaults>
</compile_context>

<pallas_src>
import math

import jax
import jax.numpy as jnp
import numpy as np
from jax import lax
from jax.experimental import pallas as pl
from jax.experimental.pallas import tpu as pltpu


def lama_kernel(x_ref, mask_ref, pt_ref, qt_ref, out_ref):
    # x_ref:    (TB, S, D)  inputs (native dtype, MXU-fed as-is)
    # mask_ref: (TB, 1, S)  mask, lane-dense over S
    # pt_ref:   (H, D)      p^T
    # qt_ref:   (H, D)      q^T
    # out_ref:  (TB, H, S)  attention (softmax over S), PyTorch output layout
    tb = x_ref.shape[0]
    p_t = pt_ref[...]
    q_t = qt_ref[...]

    for b in range(tb):  # static unroll over the batch tile
        x = x_ref[b]                                   # (S, D)
        m = mask_ref[b]                                # (1, S)
        m_f32 = m.astype(jnp.float32)

        # masked mean over S, on the MXU: (1,S)@(S,D) -> (1,D), f32 accumulation
        msum = jnp.maximum(jnp.sum(m_f32, axis=-1, keepdims=True), 1e-9)   # (1, 1)
        c = jnp.dot(m, x, preferred_element_type=jnp.float32) / msum       # (1, D)

        # p^T c -> (H,1) and q^T x^T -> (H,S): standard trans_b MXU contractions
        p_c = lax.dot_general(p_t, c, (((1,), (1,)), ((), ())),
                              preferred_element_type=jnp.float32)          # (H, 1)
        q_h = lax.dot_general(q_t, x, (((1,), (1,)), ((), ())),
                              preferred_element_type=jnp.float32)          # (H, S)

        align = jnp.tanh(p_c * q_h)                                        # (H, S)

        # L2-normalize across heads (cheap sublane reduction over H), rsqrt on EUP
        ss = jnp.sum(align * align, axis=0, keepdims=True)                 # (1, S)
        align = align * lax.rsqrt(ss)

        # masked_fill(mask == 0, -1e9) broadcast over heads, softmax over S (lanes)
        sim = jnp.where(m_f32 == 0.0, -1e9, align)                         # (H, S)
        mx = jnp.max(sim, axis=-1, keepdims=True)                          # (H, 1)
        e = jnp.exp(sim - mx)
        denom = jnp.sum(e, axis=-1, keepdims=True)                         # (H, 1)
        out_ref[b] = (e * pl.reciprocal(denom)).astype(out_ref.dtype)


def _batch_tile(B, S, D, itemsize, *, row_target=512, x_block_budget=2 << 20):
    """Largest divisor of B giving ~row_target rows of x per step within a VMEM budget."""
    cap_rows = max(1, row_target // max(S, 1))
    cap_vmem = max(1, x_block_budget // max(1, S * D * itemsize))
    tb = max(1, min(B, cap_rows, cap_vmem))
    while B % tb:
        tb -= 1
    return tb


def lama_forward(inputs, mask, p, q):
    """inputs: (B, S, D), mask: (B, S) or None, p/q: (D, H) -> (B, H, S)."""
    B, S, D = inputs.shape
    H = p.shape[1]
    if mask is None:
        # all-ones mask reproduces the mask=None path exactly (mean pooling, no fill)
        mask = jnp.ones((B, S), dtype=inputs.dtype)
    mask3 = mask.astype(inputs.dtype).reshape(B, 1, S)        # lane axis = S

    # feed p^T / q^T so in-kernel contractions are standard (no operand transposes)
    p_t = jnp.transpose(p, (1, 0))                            # (H, D)
    q_t = jnp.transpose(q, (1, 0))                            # (H, D)

    tb = _batch_tile(B, S, D, inputs.dtype.itemsize)

    return pl.pallas_call(
        lama_kernel,
        out_shape=jax.ShapeDtypeStruct((B, H, S), jnp.float32),
        grid_spec=pltpu.PrefetchScalarGridSpec(
            num_scalar_prefetch=0,
            grid=(B // tb,),
            in_specs=[
                pl.BlockSpec((tb, S, D), lambda b: (b, 0, 0)),
                pl.BlockSpec((tb, 1, S), lambda b: (b, 0, 0)),
                pl.BlockSpec((H, D), lambda b: (0, 0)),
                pl.BlockSpec((H, D), lambda b: (0, 0)),
            ],
            out_specs=pl.BlockSpec((tb, H, S), lambda b: (b, 0, 0)),
        ),
        compiler_params=pltpu.CompilerParams(
            dimension_semantics=("parallel",),      # batch tiles are independent (2 TCs on v7x)
            vmem_limit_bytes=32 * 1024 * 1024,      # block budget keeps double-buffered x small
        ),
    )(inputs, mask3, p_t, q_t)


def lama_reference(inputs, mask, p, q):
    """Pure-JAX reference mirroring the PyTorch forward."""
    m = mask.astype(inputs.dtype)
    c = jnp.sum(inputs * m[:, :, None], axis=1) / jnp.maximum(
        jnp.sum(m, axis=1, keepdims=True), 1e-9
    )                                                           # (B, D)
    p_c_g = (c @ p)[:, :, None]                                 # (B, H, 1)
    q_h = jnp.einsum("dh,bsd->bhs", q, inputs)                  # (B, H, S)
    alignment = jnp.tanh(p_c_g * q_h)                           # (B, H, S)
    alignment = alignment / jnp.linalg.norm(alignment, axis=1, keepdims=True)
    sim = jnp.where(m[:, None, :] == 0, -1e9, alignment)
    return jax.nn.softmax(sim, axis=-1)


if __name__ == "__main__":
    B, S, D, H = 2, 8, 32, 4

    key = jax.random.PRNGKey(0)
    k_x, k_p, k_q = jax.random.split(key, 3)

    inputs = jax.random.normal(k_x, (B, S, D), dtype=jnp.float32)
    # mask: first 6 timesteps valid, last 2 padded
    mask = jnp.concatenate(
        [jnp.ones((B, 6), jnp.float32), jnp.zeros((B, 2), jnp.float32)], axis=1
    )

    # kaiming_uniform_(a=sqrt(5)) on a (D, H) tensor -> bound = 1/sqrt(fan_in) = 1/sqrt(H)
    bound = 1.0 / math.sqrt(H)
    p = jax.random.uniform(k_p, (D, H), minval=-bound, maxval=bound, dtype=jnp.float32)
    q = jax.random.uniform(k_q, (D, H), minval=-bound, maxval=bound, dtype=jnp.float32)

    out = lama_forward(inputs, mask, p, q)
    jax.block_until_ready(out)

    ref = lama_reference(inputs, mask, p, q)
    assert out.shape == (B, H, S)
    np.testing.assert_allclose(np.asarray(out), np.asarray(ref), rtol=1e-4, atol=1e-5)

    # also exercise the mask=None path
    out_none = lama_forward(inputs, None, p, q)
    ref_none = lama_reference(inputs, jnp.ones((B, S), jnp.float32), p, q)
    jax.block_until_ready(out_none)
    np.testing.assert_allclose(np.asarray(out_none), np.asarray(ref_none),
                               rtol=1e-4, atol=1e-5)

    print("KERNEL_OK")
</pallas_src>

<mosaic_0001>
module attributes {stable_mosaic.version = 11 : i64} {
  func.func @lama_kernel(%arg0: i32, %arg1: memref<2x8x32xf32, #tpu.memory_space<vmem>>, %arg2: memref<2x1x8xf32, #tpu.memory_space<vmem>>, %arg3: memref<4x32xf32, #tpu.memory_space<vmem>>, %arg4: memref<4x32xf32, #tpu.memory_space<vmem>>, %arg5: memref<2x4x8xf32, #tpu.memory_space<vmem>>) attributes {dimension_semantics = [#tpu.dimension_semantics<parallel>], iteration_bounds = array<i64: 1>, scalar_prefetch = 0 : i64, scratch_operands = 0 : i64, tpu.core_type = #tpu.core_type<tc>, window_params = [{transform_indices = @transform_0, window_bounds = array<i64: 2, 8, 32>}, {transform_indices = @transform_1, window_bounds = array<i64: 2, 1, 8>}, {pipeline_mode = #tpu.pipeline_mode<synchronous>, transform_indices = @transform_2, window_bounds = array<i64: 4, 32>}, {pipeline_mode = #tpu.pipeline_mode<synchronous>, transform_indices = @transform_3, window_bounds = array<i64: 4, 32>}, {transform_indices = @transform_4, window_bounds = array<i64: 2, 4, 8>}]} {
    %c0 = arith.constant 0 : index
    %c0_0 = arith.constant 0 : index
    %0 = vector.load %arg3[%c0, %c0_0] : memref<4x32xf32, #tpu.memory_space<vmem>>, vector<4x32xf32>
    %c0_1 = arith.constant 0 : index
    %c0_2 = arith.constant 0 : index
    %1 = vector.load %arg4[%c0_1, %c0_2] : memref<4x32xf32, #tpu.memory_space<vmem>>, vector<4x32xf32>
    %c0_3 = arith.constant 0 : index
    %c0_4 = arith.constant 0 : index
    %c0_5 = arith.constant 0 : index
    %2 = vector.load %arg1[%c0_3, %c0_4, %c0_5] : memref<2x8x32xf32, #tpu.memory_space<vmem>>, vector<1x8x32xf32>
    %3 = vector.shape_cast %2 : vector<1x8x32xf32> to vector<8x32xf32>
    %c0_6 = arith.constant 0 : index
    %c0_7 = arith.constant 0 : index
    %c0_8 = arith.constant 0 : index
    %4 = vector.load %arg2[%c0_6, %c0_7, %c0_8] : memref<2x1x8xf32, #tpu.memory_space<vmem>>, vector<1x1x8xf32>
    %5 = vector.shape_cast %4 : vector<1x1x8xf32> to vector<1x8xf32>
    %cst = arith.constant dense<0.000000e+00> : vector<1xf32>
    %6 = vector.multi_reduction <add>, %5, %cst [1] : vector<1x8xf32> to vector<1xf32>
    %7 = vector.shape_cast %6 : vector<1xf32> to vector<1x1xf32>
    %cst_9 = arith.constant 9.99999971E-10 : f32
    %8 = vector.broadcast %cst_9 : f32 to vector<1x1xf32>
    %9 = arith.maximumf %7, %8 : vector<1x1xf32>
    %cst_10 = arith.constant dense<0.000000e+00> : vector<1x32xf32>
    %10 = tpu.matmul %5, %3, %cst_10 {dimension_numbers = #tpu.dot_dimension_numbers<[1], [0], [0], [1], [0, 0, 1, 1], [], []>} : vector<1x8xf32>, vector<8x32xf32>, vector<1x32xf32> -> vector<1x32xf32>
    %11 = vector.broadcast %9 : vector<1x1xf32> to vector<1x32xf32>
    %12 = arith.divf %10, %11 : vector<1x32xf32>
    %cst_11 = arith.constant dense<0.000000e+00> : vector<4x1xf32>
    %13 = tpu.matmul %0, %12, %cst_11 {dimension_numbers = #tpu.dot_dimension_numbers<[1], [1], [0], [0], [0, 0, 1, 0], [], []>} : vector<4x32xf32>, vector<1x32xf32>, vector<4x1xf32> -> vector<4x1xf32>
    %cst_12 = arith.constant dense<0.000000e+00> : vector<4x8xf32>
    %14 = tpu.matmul %1, %3, %cst_12 {dimension_numbers = #tpu.dot_dimension_numbers<[1], [1], [0], [0], [0, 0, 1, 0], [], []>} : vector<4x32xf32>, vector<8x32xf32>, vector<4x8xf32> -> vector<4x8xf32>
    %15 = vector.broadcast %13 : vector<4x1xf32> to vector<4x8xf32>
    %16 = arith.mulf %15, %14 : vector<4x8xf32>
    %17 = math.tanh %16 : vector<4x8xf32>
    %18 = arith.mulf %17, %17 : vector<4x8xf32>
    %cst_13 = arith.constant dense<0.000000e+00> : vector<8xf32>
    %19 = vector.multi_reduction <add>, %18, %cst_13 [0] : vector<4x8xf32> to vector<8xf32>
    %20 = vector.shape_cast %19 : vector<8xf32> to vector<1x8xf32>
    %21 = math.rsqrt %20 : vector<1x8xf32>
    %22 = vector.broadcast %21 : vector<1x8xf32> to vector<4x8xf32>
    %23 = arith.mulf %17, %22 : vector<4x8xf32>
    %cst_14 = arith.constant 0.000000e+00 : f32
    %24 = vector.broadcast %cst_14 : f32 to vector<1x8xf32>
    %25 = arith.cmpf oeq, %5, %24 : vector<1x8xf32>
    %cst_15 = arith.constant -1.000000e+09 : f32
    %26 = vector.shape_cast %25 : vector<1x8xi1> to vector<1x8xi1>
    %27 = vector.broadcast %26 : vector<1x8xi1> to vector<4x8xi1>
    %28 = vector.broadcast %cst_15 : f32 to vector<4x8xf32>
    %29 = arith.select %27, %28, %23 : vector<4x8xi1>, vector<4x8xf32>
    %cst_16 = arith.constant dense<0xFF800000> : vector<4xf32>
    %30 = vector.multi_reduction <maximumf>, %29, %cst_16 [1] : vector<4x8xf32> to vector<4xf32>
    %31 = vector.shape_cast %30 : vector<4xf32> to vector<4x1xf32>
    %32 = vector.broadcast %31 : vector<4x1xf32> to vector<4x8xf32>
    %33 = arith.subf %29, %32 : vector<4x8xf32>
    %34 = math.exp %33 : vector<4x8xf32>
    %cst_17 = arith.constant dense<0.000000e+00> : vector<4xf32>
    %35 = vector.multi_reduction <add>, %34, %cst_17 [1] : vector<4x8xf32> to vector<4xf32>
    %36 = vector.shape_cast %35 : vector<4xf32> to vector<4x1xf32>
    %37 = tpu.reciprocal %36 : vector<4x1xf32> -> vector<4x1xf32>
    %38 = vector.broadcast %37 : vector<4x1xf32> to vector<4x8xf32>
    %39 = arith.mulf %34, %38 : vector<4x8xf32>
    %c0_18 = arith.constant 0 : index
    %c0_19 = arith.constant 0 : index
    %c0_20 = arith.constant 0 : index
    %40 = vector.load %arg5[%c0_18, %c0_19, %c0_20] : memref<2x4x8xf32, #tpu.memory_space<vmem>>, vector<1x4x8xf32>
    %41 = vector.shape_cast %40 : vector<1x4x8xf32> to vector<4x8xf32>
    %42 = vector.shape_cast %39 : vector<4x8xf32> to vector<1x4x8xf32>
    tpu.vector_store %arg5[%c0_18, %c0_19, %c0_20], %42 {strides = array<i32>} : memref<2x4x8xf32, #tpu.memory_space<vmem>>, vector<1x4x8xf32>,
    %c1 = arith.constant 1 : index
    %c0_21 = arith.constant 0 : index
    %c0_22 = arith.constant 0 : index
    %43 = vector.load %arg1[%c1, %c0_21, %c0_22] : memref<2x8x32xf32, #tpu.memory_space<vmem>>, vector<1x8x32xf32>
    %44 = vector.shape_cast %43 : vector<1x8x32xf32> to vector<8x32xf32>
    %c1_23 = arith.constant 1 : index
    %c0_24 = arith.constant 0 : index
    %c0_25 = arith.constant 0 : index
    %45 = vector.load %arg2[%c1_23, %c0_24, %c0_25] : memref<2x1x8xf32, #tpu.memory_space<vmem>>, vector<1x1x8xf32>
    %46 = vector.shape_cast %45 : vector<1x1x8xf32> to vector<1x8xf32>
    %cst_26 = arith.constant dense<0.000000e+00> : vector<1xf32>
    %47 = vector.multi_reduction <add>, %46, %cst_26 [1] : vector<1x8xf32> to vector<1xf32>
    %48 = vector.shape_cast %47 : vector<1xf32> to vector<1x1xf32>
    %cst_27 = arith.constant 9.99999971E-10 : f32
    %49 = vector.broadcast %cst_27 : f32 to vector<1x1xf32>
    %50 = arith.maximumf %48, %49 : vector<1x1xf32>
    %cst_28 = arith.constant dense<0.000000e+00> : vector<1x32xf32>
    %51 = tpu.matmul %46, %44, %cst_28 {dimension_numbers = #tpu.dot_dimension_numbers<[1], [0], [0], [1], [0, 0, 1, 1], [], []>} : vector<1x8xf32>, vector<8x32xf32>, vector<1x32xf32> -> vector<1x32xf32>
    %52 = vector.broadcast %50 : vector<1x1xf32> to vector<1x32xf32>
    %53 = arith.divf %51, %52 : vector<1x32xf32>
    %cst_29 = arith.constant dense<0.000000e+00> : vector<4x1xf32>
    %54 = tpu.matmul %0, %53, %cst_29 {dimension_numbers = #tpu.dot_dimension_numbers<[1], [1], [0], [0], [0, 0, 1, 0], [], []>} : vector<4x32xf32>, vector<1x32xf32>, vector<4x1xf32> -> vector<4x1xf32>
    %cst_30 = arith.constant dense<0.000000e+00> : vector<4x8xf32>
    %55 = tpu.matmul %1, %44, %cst_30 {dimension_numbers = #tpu.dot_dimension_numbers<[1], [1], [0], [0], [0, 0, 1, 0], [], []>} : vector<4x32xf32>, vector<8x32xf32>, vector<4x8xf32> -> vector<4x8xf32>
    %56 = vector.broadcast %54 : vector<4x1xf32> to vector<4x8xf32>
    %57 = arith.mulf %56, %55 : vector<4x8xf32>
    %58 = math.tanh %57 : vector<4x8xf32>
    %59 = arith.mulf %58, %58 : vector<4x8xf32>
    %cst_31 = arith.constant dense<0.000000e+00> : vector<8xf32>
    %60 = vector.multi_reduction <add>, %59, %cst_31 [0] : vector<4x8xf32> to vector<8xf32>
    %61 = vector.shape_cast %60 : vector<8xf32> to vector<1x8xf32>
    %62 = math.rsqrt %61 : vector<1x8xf32>
    %63 = vector.broadcast %62 : vector<1x8xf32> to vector<4x8xf32>
    %64 = arith.mulf %58, %63 : vector<4x8xf32>
    %cst_32 = arith.constant 0.000000e+00 : f32
    %65 = vector.broadcast %cst_32 : f32 to vector<1x8xf32>
    %66 = arith.cmpf oeq, %46, %65 : vector<1x8xf32>
    %cst_33 = arith.constant -1.000000e+09 : f32
    %67 = vector.shape_cast %66 : vector<1x8xi1> to vector<1x8xi1>
    %68 = vector.broadcast %67 : vector<1x8xi1> to vector<4x8xi1>
    %69 = vector.broadcast %cst_33 : f32 to vector<4x8xf32>
    %70 = arith.select %68, %69, %64 : vector<4x8xi1>, vector<4x8xf32>
    %cst_34 = arith.constant dense<0xFF800000> : vector<4xf32>
    %71 = vector.multi_reduction <maximumf>, %70, %cst_34 [1] : vector<4x8xf32> to vector<4xf32>
    %72 = vector.shape_cast %71 : vector<4xf32> to vector<4x1xf32>
    %73 = vector.broadcast %72 : vector<4x1xf32> to vector<4x8xf32>
    %74 = arith.subf %70, %73 : vector<4x8xf32>
    %75 = math.exp %74 : vector<4x8xf32>
    %cst_35 = arith.constant dense<0.000000e+00> : vector<4xf32>
    %76 = vector.multi_reduction <add>, %75, %cst_35 [1] : vector<4x8xf32> to vector<4xf32>
    %77 = vector.shape_cast %76 : vector<4xf32> to vector<4x1xf32>
    %78 = tpu.reciprocal %77 : vector<4x1xf32> -> vector<4x1xf32>
    %79 = vector.broadcast %78 : vector<4x1xf32> to vector<4x8xf32>
    %80 = arith.mulf %75, %79 : vector<4x8xf32>
    %c1_36 = arith.constant 1 : index
    %c0_37 = arith.constant 0 : index
    %c0_38 = arith.constant 0 : index
    %81 = vector.load %arg5[%c1_36, %c0_37, %c0_38] : memref<2x4x8xf32, #tpu.memory_space<vmem>>, vector<1x4x8xf32>
    %82 = vector.shape_cast %81 : vector<1x4x8xf32> to vector<4x8xf32>
    %83 = vector.shape_cast %80 : vector<4x8xf32> to vector<1x4x8xf32>
    tpu.vector_store %arg5[%c1_36, %c0_37, %c0_38], %83 {strides = array<i32>} : memref<2x4x8xf32, #tpu.memory_space<vmem>>, vector<1x4x8xf32>,
    return
  }
  func.func @transform_0(%arg0: i32) -> (i32, i32, i32) {
    %c0_i32 = arith.constant 0 : i32
    %c0_i32_0 = arith.constant 0 : i32
    %c0_i32_1 = arith.constant 0 : i32
    return %arg0, %c0_i32, %c0_i32_0 : i32, i32, i32
  }
  func.func @transform_1(%arg0: i32) -> (i32, i32, i32) {
    %c0_i32 = arith.constant 0 : i32
    %c0_i32_0 = arith.constant 0 : i32
    %c0_i32_1 = arith.constant 0 : i32
    return %arg0, %c0_i32, %c0_i32_0 : i32, i32, i32
  }
  func.func @transform_2(%arg0: i32) -> (i32, i32) {
    %c0_i32 = arith.constant 0 : i32
    %c0_i32_0 = arith.constant 0 : i32
    %c0_i32_1 = arith.constant 0 : i32
    return %c0_i32, %c0_i32_0 : i32, i32
  }
  func.func @transform_3(%arg0: i32) -> (i32, i32) {
    %c0_i32 = arith.constant 0 : i32
    %c0_i32_0 = arith.constant 0 : i32
    %c0_i32_1 = arith.constant 0 : i32
    return %c0_i32, %c0_i32_0 : i32, i32
  }
  func.func @transform_4(%arg0: i32) -> (i32, i32, i32) {
    %c0_i32 = arith.constant 0 : i32
    %c0_i32_0 = arith.constant 0 : i32
    %c0_i32_1 = arith.constant 0 : i32
    return %arg0, %c0_i32, %c0_i32_0 : i32, i32, i32
  }
}

</mosaic_0001>

<llo_original>
// kernel: tpu_custom_call.1
$region0: #{tpu_custom_call.1}
  #allocation0 [shape = 'u32[]', space=smem, size = 0x4, offset = 0x4, fixed_abs, tag = 'smem constant byte address 0x4 - core index']
  #allocation1 [shape = 'u32[72,128]{1,0:T(1,128)}', space=vmem, size = 0x9000, scoped, tag = 'internal scratch']
  %s0 = inlined_call_operand.hbm [shape: f32[2,8,32], index: 0, kind: input, shape index: {}]
  %s1 = inlined_call_operand.hbm [shape: f32[2,1,8], index: 1, kind: input, shape index: {}]
  %s2 = inlined_call_operand.hbm [shape: f32[4,32], index: 2, kind: input, shape index: {}]
  %s3 = inlined_call_operand.hbm [shape: f32[4,32], index: 3, kind: input, shape index: {}]
  %s4 = inlined_call_operand.hbm [shape: f32[2,4,8], index: 4, kind: output, shape index: {}]
  %s5 = sld [smem:[#allocation0]]
  $region42: #{tpu_custom_call.1} parent=0
    _
  %s7 = ssub.s32 1, %s5
  %s8 = scalar_select 0, %s7, %s5
  $region1: #{tpu_custom_call.1} parent=0
    #allocation2 [shape = 'u8[8192]{0}', space=vmem, size = 0x2000, scoped, tag = 'input window, operand 0, single buffered']
    #allocation3 [shape = 's32[1]{0}', space=sflag, size = 0x4, scoped, tag = 'scoped memory for tpu_custom_call.1']
    #allocation4 [shape = 's32[1]{0}', space=sflag, size = 0x4, scoped, tag = 'scoped memory for tpu_custom_call.1']
    #allocation5 [shape = 'u8[1024]{0}', space=vmem, size = 0x400, scoped, tag = 'input window, operand 1, single buffered']
    #allocation6 [shape = 's32[1]{0}', space=sflag, size = 0x4, scoped, tag = 'scoped memory for tpu_custom_call.1']
    #allocation7 [shape = 'u8[2048]{0}', space=vmem, size = 0x800, scoped, tag = 'input window, operand 2, single buffered']
    #allocation8 [shape = 'u8[2048]{0}', space=vmem, size = 0x800, scoped, tag = 'input window, operand 3, single buffered']
    #allocation9 [shape = 's32[1]{0}', space=sflag, size = 0x4, scoped, tag = 'scoped memory for tpu_custom_call.1']
    #allocation10 [shape = 'u8[4096]{0}', space=vmem, size = 0x1000, scoped, tag = 'output window, operand 0, single buffered']
    %9 = vsyncpa [#allocation3], 0
    %10 = vsyncpa [#allocation6], 0
    %11 = vsyncpa [#allocation9], 0
    %12 = vsyncpa [#allocation4], 0
    // Predicated region
    $region2: #{tpu_custom_call.1} parent=1 // pred_check
      _
    $region3: #{tpu_custom_call.1} parent=1 // pred_check_branch
      %14 = sbr.rel (0) target = $region5
    $region4: #{tpu_custom_call.1} parent=1 // pred_region
      %16 = vsyncadd [#allocation3], 0
      %s17 = sshll.u32 %s0, 4
      %s18 = int_to_ptr.hbm [resolvable:$true] %s17
      %s19 = sshll.u32 [#allocation2], 4
      %s20 = int_to_ptr.vmem [resolvable:$true] %s19
      %25 = dma.hbm_to_vmem [thread:$0]  %s18, 256, %s20, [#allocation3], 128, 128, 8
    $region5: #{tpu_custom_call.1} parent=1 // pred_fallthru
      _
    // Predicated region
    $region6: #{tpu_custom_call.1} parent=1 // pred_check
      _
    $region7: #{tpu_custom_call.1} parent=1 // pred_check_branch
      %27 = sbr.rel (0) target = $region9
    $region8: #{tpu_custom_call.1} parent=1 // pred_region
      %29 = vsyncadd [#allocation6], 0
      %s30 = sshll.u32 %s1, 4
      %s31 = int_to_ptr.hbm [resolvable:$true] %s30
      %s32 = sshll.u32 [#allocation5], 4
      %s33 = int_to_ptr.vmem [resolvable:$true] %s32
      %38 = dma.hbm_to_vmem [thread:$0]  %s31, 32, %s33, [#allocation6], 16, 16, 1
    $region9: #{tpu_custom_call.1} parent=1 // pred_fallthru
      _
    // Predicated region
    $region10: #{tpu_custom_call.1} parent=1 // pred_check
      _
    $region11: #{tpu_custom_call.1} parent=1 // pred_check_branch
      %40 = sbr.rel (0) target = $region13
    $region12: #{tpu_custom_call.1} parent=1 // pred_region
      %42 = vsyncadd [#allocation6], 0
      %s44 = sshll.u32 %s2, 4
      %s45 = int_to_ptr.hbm [resolvable:$true] %s44
      %s46 = sshll.u32 [#allocation7], 4
      %s47 = int_to_ptr.vmem [resolvable:$true] %s46
      %49 = dma.hbm_to_vmem [thread:$0]  %s45, 64, %s47, [#allocation6]
    $region13: #{tpu_custom_call.1} parent=1 // pred_fallthru
      _
    // Predicated region
    $region14: #{tpu_custom_call.1} parent=1 // pred_check
      _
    $region15: #{tpu_custom_call.1} parent=1 // pred_check_branch
      %51 = sbr.rel (0) target = $region17
    $region16: #{tpu_custom_call.1} parent=1 // pred_region
      %53 = vsyncadd [#allocation9], 0
      %s55 = sshll.u32 %s3, 4
      %s56 = int_to_ptr.hbm [resolvable:$true] %s55
      %s57 = sshll.u32 [#allocation8], 4
      %s58 = int_to_ptr.vmem [resolvable:$true] %s57
      %60 = dma.hbm_to_vmem [thread:$0]  %s56, 64, %s58, [#allocation9]
    $region17: #{tpu_custom_call.1} parent=1 // pred_fallthru
      _
    // Predicated region
    $region18: #{tpu_custom_call.1} parent=1 // pred_check
      _
    $region19: #{tpu_custom_call.1} parent=1 // pred_check_branch
      %62 = sbr.rel (0) target = $region21
    $region20: #{tpu_custom_call.1} parent=1 // pred_region
      %64 = dma.done [#allocation3], 256
    $region21: #{tpu_custom_call.1} parent=1 // pred_fallthru
      _
    // Predicated region
    $region22: #{tpu_custom_call.1} parent=1 // pred_check
      _
    $region23: #{tpu_custom_call.1} parent=1 // pred_check_branch
      %66 = sbr.rel (0) target = $region25
    $region24: #{tpu_custom_call.1} parent=1 // pred_region
      %68 = dma.done [#allocation6], 32
    $region25: #{tpu_custom_call.1} parent=1 // pred_fallthru
      _
    // Predicated region
    $region26: #{tpu_custom_call.1} parent=1 // pred_check
      _
    $region27: #{tpu_custom_call.1} parent=1 // pred_check_branch
      %70 = sbr.rel (0) target = $region29
    $region28: #{tpu_custom_call.1} parent=1 // pred_region
      %72 = dma.done [#allocation6], 64
    $region29: #{tpu_custom_call.1} parent=1 // pred_fallthru
      _
    // Predicated region
    $region30: #{tpu_custom_call.1} parent=1 // pred_check
      _
    $region31: #{tpu_custom_call.1} parent=1 // pred_check_branch
      %74 = sbr.rel (0) target = $region33
    $region32: #{tpu_custom_call.1} parent=1 // pred_region
      %76 = dma.done [#allocation9], 64
    $region33: #{tpu_custom_call.1} parent=1 // pred_fallthru
      _
    %v77 = vld [vmem:[#allocation7] sm:$0xf]
    %v78 = vld [vmem:[#allocation8] sm:$0xf]
    %v79 = vld [vmem:[#allocation2] sm:$0xff]
    %v80 = vld [vmem:[#allocation5] sm:$0x1]
    %vm81 = vcmask 57344
    %v82 = vsel %vm81, %v80, 0.0
    %83 = vadd.xlane.f32.xlu0 %v82
    %v84 = vpop.xlane.xlu0 %83
    %v85 = vmax.f32 %v84, 1e-09
    %vm86 = vcmask 64512
    %v88 = vsel %vm86, %v80, 0
    %90 = vmatpush.msra.mxu0 0.0
    %91 = vmatpush.msra.mxu0 0.0
    %92 = vmatpush.msra.mxu0 0.0
    %93 = vmatpush.msra.mxu0 0.0
    %94 = vmatpush.msra.mxu0 0.0
    %95 = vmatpush.msra.mxu0 0.0
    %96 = vmatpush.msra.mxu0 0.0
    %97 = vmatpush.msra.mxu0 0.0
    %98 = vmatpush.msra.mxu0 0.0
    %99 = vmatpush.msra.mxu0 0.0
    %100 = vmatpush.msra.mxu0 0.0
    %101 = vmatpush.msra.mxu0 0.0
    %102 = vmatpush.msra.mxu0 0.0
    %103 = vmatpush.msra.mxu0 0.0
    %104 = vmatpush.msra.mxu0 0.0
    %105 = vmatpush.msra.mxu0 %v79
    %106 = vmatmul.f32.gmra.mxu0 %v88
    %v107 = vpop.f32.mrf.mxu0
    %v108 = vadd.f32 0.0, %v107
    %109 = vdwg.mxu0
    %v110 = vrcp.pop %v85
    %v111 = vmul.f32 %v85, %v110
    %v112 = vsub.f32 1.0, %v111
    %v113 = vmul.f32 %v110, %v112
    %v114 = vadd.f32 %v110, %v113
    %vm115 = vweird.f32 %v85
    %vm116 = vweird.f32 %v110
    %vm117 = vmor %vm115, %vm116
    %v118 = vsel %vm117, %v110, %v114
    %v119 = vand.u32 2147483647, %v85
    %vm120 = vcmp.eq.f32.partialorder %v119, 8.507059e+37
    %v121 = vand.u32 %v85, 2147483648
    %v122 = vor.u32 1.1754944e-38, %v121
    %v123 = vsel %vm120, %v122, %v118
    %v124 = vmul.f32 %v108, %v123
    %v125 = vperm.slane %v124, 0
    %v126 = vmul.f32 %v77, %v125
    %vm127 = vcmask 257024
    %v128 = vsel %vm127, %v126, 0.0
    %129 = vadd.xlane.f32.xlu0 %v128
    %v130 = vpop.xlane.xlu0 %129
    %vm131 = vcmask 261120
    %v133 = vsel %vm131, %v78, 0
    %v136 = vsel %vm131, %v79, 0
    %138 = vmatpush.xpose.msra.mxu0 0.0
    %139 = vmatpush.xpose.msra.mxu0 0.0
    %140 = vmatpush.xpose.msra.mxu0 0.0
    %141 = vmatpush.xpose.msra.mxu0 0.0
    %142 = vmatpush.xpose.msra.mxu0 0.0
    %143 = vmatpush.xpose.msra.mxu0 0.0
    %144 = vmatpush.xpose.msra.mxu0 0.0
    %145 = vmatpush.xpose.msra.mxu0 0.0
    %146 = vmatpush.xpose.msra.mxu0 0.0
    %147 = vmatpush.xpose.msra.mxu0 0.0
    %148 = vmatpush.xpose.msra.mxu0 0.0
    %149 = vmatpush.xpose.msra.mxu0 0.0
    %150 = vmatpush.xpose.msra.mxu0 0.0
    %151 = vmatpush.xpose.msra.mxu0 0.0
    %152 = vmatpush.xpose.msra.mxu0 0.0
    %153 = vmatpush.xpose.msra.mxu0 %v136
    %154 = vmatmul.f32.gmra.mxu0 %v133
    %v155 = vpop.f32.mrf.mxu0
    %v156 = vadd.f32 0.0, %v155
    %157 = vdwg.mxu0
    %v158 = vmul.f32 %v130, %v156
    %v159 = vtanh.pop %v158
    %v160 = vmul.f32 %v159, %v159
    %vm161 = vcmask 60416
    %v162 = vsel %vm161, %v160, 0.0
    %v163 = vrot.slane %v162, 4
    %v164 = vadd.f32 %v162, %v163
    %v165 = vrot.slane %v164, 2
    %v166 = vadd.f32 %v164, %v165
    %v167 = vrot.slane %v166, 1
    %v168 = vadd.f32 %v166, %v167
    %v169 = vrsqrt.pop %v168
    %v170 = vmul.f32 %v169, %v168
    %v171 = vmul.f32 %v170, %v169
    %v172 = vmul.f32 0.5, %v171
    %v173 = vsub.f32 1.5, %v172
    %v174 = vmul.f32 %v169, %v173
    %vm175 = vweird.f32 %v168
    %vm176 = vweird.f32 %v169
    %vm177 = vmor %vm175, %vm176
    %v178 = vsel %vm177, %v169, %v174
    %v179 = vmul.f32 %v159, %v178
    %vm180 = vcmp.eq.f32.partialorder %v80, 0.0
    %v181 = vsel %vm180, 1, 0
    %v182 = vperm.slane %v181, 0
    %vm183 = vcmp.eq.s32.totalorder %v182, 1
    %v184 = vsel %vm183, -1e+09, %v179
    %v185 = vsel %vm161, %v184, -inf
    %186 = vmax.xlane.f32.xlu0 %v185
    %v187 = vpop.xlane.xlu0 %186
    %v188 = vsub.f32 %v184, %v187
    %v189 = vmul.f32 %v188, 1.442695
    %v190 = vpow.pop %v189
    %v191 = vsel %vm161, %v190, 0.0
    %192 = vadd.xlane.f32.xlu0 %v191
    %v193 = vpop.xlane.xlu0 %192
    %v194 = vrcp.pop %v193
    %v195 = vmul.f32 %v193, %v194
    %v196 = vsub.f32 1.0, %v195
    %v197 = vmul.f32 %v194, %v196
    %v198 = vadd.f32 %v194, %v197
    %vm199 = vweird.f32 %v193
    %vm200 = vweird.f32 %v194
    %vm201 = vmor %vm199, %vm200
    %v202 = vsel %vm201, %v194, %v198
    %v203 = vand.u32 2147483647, %v193
    %vm204 = vcmp.eq.f32.partialorder %v203, 8.507059e+37
    %v205 = vand.u32 %v193, 2147483648
    %v206 = vor.u32 1.1754944e-38, %v205
    %v207 = vsel %vm204, %v206, %v202
    %v208 = vmul.f32 %v190, %v207
    %209 = vst.msk [vmem:[#allocation10] sm:$0xf] %vm161, %v208
    %s210 = scalar_lea.vmem [#allocation2], 8
    %v211 = vld [vmem:[%s210] sm:$0xff]
    %s212 = scalar_lea.vmem [#allocation5], 1
    %v213 = vld [vmem:[%s212] sm:$0x1]
    %v214 = vsel %vm81, %v213, 0.0
    %215 = vadd.xlane.f32.xlu0 %v214
    %v216 = vpop.xlane.xlu0 %215
    %v217 = vmax.f32 %v216, 1e-09
    %v219 = vsel %vm86, %v213, 0
    %221 = vmatpush.msra.mxu0 0.0
    %222 = vmatpush.msra.mxu0 0.0
    %223 = vmatpush.msra.mxu0 0.0
    %224 = vmatpush.msra.mxu0 0.0
    %225 = vmatpush.msra.mxu0 0.0
    %226 = vmatpush.msra.mxu0 0.0
    %227 = vmatpush.msra.mxu0 0.0
    %228 = vmatpush.msra.mxu0 0.0
    %229 = vmatpush.msra.mxu0 0.0
    %230 = vmatpush.msra.mxu0 0.0
    %231 = vmatpush.msra.mxu0 0.0
    %232 = vmatpush.msra.mxu0 0.0
    %233 = vmatpush.msra.mxu0 0.0
    %234 = vmatpush.msra.mxu0 0.0
    %235 = vmatpush.msra.mxu0 0.0
    %236 = vmatpush.msra.mxu0 %v211
    %237 = vmatmul.f32.gmra.mxu0 %v219
    %v238 = vpop.f32.mrf.mxu0
    %v239 = vadd.f32 0.0, %v238
    %240 = vdwg.mxu0
    %v241 = vrcp.pop %v217
    %v242 = vmul.f32 %v217, %v241
    %v243 = vsub.f32 1.0, %v242
    %v244 = vmul.f32 %v241, %v243
    %v245 = vadd.f32 %v241, %v244
    %vm246 = vweird.f32 %v217
    %vm247 = vweird.f32 %v241
    %vm248 = vmor %vm246, %vm247
    %v249 = vsel %vm248, %v241, %v245
    %v250 = vand.u32 2147483647, %v217
    %vm251 = vcmp.eq.f32.partialorder %v250, 8.507059e+37
    %v252 = vand.u32 %v217, 2147483648
    %v253 = vor.u32 1.1754944e-38, %v252
    %v254 = vsel %vm251, %v253, %v249
    %v255 = vmul.f32 %v239, %v254
    %v256 = vperm.slane %v255, 0
    %v257 = vmul.f32 %v77, %v256
    %v258 = vsel %vm127, %v257, 0.0
    %259 = vadd.xlane.f32.xlu0 %v258
    %v260 = vpop.xlane.xlu0 %259
    %v262 = vsel %vm131, %v211, 0
    %264 = vmatpush.xpose.msra.mxu0 0.0
    %265 = vmatpush.xpose.msra.mxu0 0.0
    %266 = vmatpush.xpose.msra.mxu0 0.0
    %267 = vmatpush.xpose.msra.mxu0 0.0
    %268 = vmatpush.xpose.msra.mxu0 0.0
    %269 = vmatpush.xpose.msra.mxu0 0.0
    %270 = vmatpush.xpose.msra.mxu0 0.0
    %271 = vmatpush.xpose.msra.mxu0 0.0
    %272 = vmatpush.xpose.msra.mxu0 0.0
    %273 = vmatpush.xpose.msra.mxu0 0.0
    %274 = vmatpush.xpose.msra.mxu0 0.0
    %275 = vmatpush.xpose.msra.mxu0 0.0
    %276 = vmatpush.xpose.msra.mxu0 0.0
    %277 = vmatpush.xpose.msra.mxu0 0.0
    %278 = vmatpush.xpose.msra.mxu0 0.0
    %279 = vmatpush.xpose.msra.mxu0 %v262
    %280 = vmatmul.f32.gmra.mxu0 %v133
    %v281 = vpop.f32.mrf.mxu0
    %v282 = vadd.f32 0.0, %v281
    %283 = vdwg.mxu0
    %v284 = vmul.f32 %v260, %v282
    %v285 = vtanh.pop %v284
    %v286 = vmul.f32 %v285, %v285
    %v287 = vsel %vm161, %v286, 0.0
    %v288 = vrot.slane %v287, 4
    %v289 = vadd.f32 %v287, %v288
    %v290 = vrot.slane %v289, 2
    %v291 = vadd.f32 %v289, %v290
    %v292 = vrot.slane %v291, 1
    %v293 = vadd.f32 %v291, %v292
    %v294 = vrsqrt.pop %v293
    %v295 = vmul.f32 %v294, %v293
    %v296 = vmul.f32 %v295, %v294
    %v297 = vmul.f32 0.5, %v296
    %v298 = vsub.f32 1.5, %v297
    %v299 = vmul.f32 %v294, %v298
    %vm300 = vweird.f32 %v293
    %vm301 = vweird.f32 %v294
    %vm302 = vmor %vm300, %vm301
    %v303 = vsel %vm302, %v294, %v299
    %v304 = vmul.f32 %v285, %v303
    %vm305 = vcmp.eq.f32.partialorder %v213, 0.0
    %v306 = vsel %vm305, 1, 0
    %v307 = vperm.slane %v306, 0
    %vm308 = vcmp.eq.s32.totalorder %v307, 1
    %v309 = vsel %vm308, -1e+09, %v304
    %v310 = vsel %vm161, %v309, -inf
    %311 = vmax.xlane.f32.xlu0 %v310
    %v312 = vpop.xlane.xlu0 %311
    %v313 = vsub.f32 %v309, %v312
    %v314 = vmul.f32 %v313, 1.442695
    %v315 = vpow.pop %v314
    %v316 = vsel %vm161, %v315, 0.0
    %317 = vadd.xlane.f32.xlu0 %v316
    %v318 = vpop.xlane.xlu0 %317
    %v319 = vrcp.pop %v318
    %v320 = vmul.f32 %v318, %v319
    %v321 = vsub.f32 1.0, %v320
    %v322 = vmul.f32 %v319, %v321
    %v323 = vadd.f32 %v319, %v322
    %vm324 = vweird.f32 %v318
    %vm325 = vweird.f32 %v319
    %vm326 = vmor %vm324, %vm325
    %v327 = vsel %vm326, %v319, %v323
    %v328 = vand.u32 2147483647, %v318
    %vm329 = vcmp.eq.f32.partialorder %v328, 8.507059e+37
    %v330 = vand.u32 %v318, 2147483648
    %v331 = vor.u32 1.1754944e-38, %v330
    %v332 = vsel %vm329, %v331, %v327
    %v333 = vmul.f32 %v315, %v332
    %s334 = scalar_lea.vmem [#allocation10], 4
    %335 = vst.msk [vmem:[%s334] sm:$0xf] %vm161, %v333
    // Predicated region
    $region34: #{tpu_custom_call.1} parent=1 // pred_check
      _
    $region35: #{tpu_custom_call.1} parent=1 // pred_check_branch
      %337 = sbr.rel (0) target = $region37
    $region36: #{tpu_custom_call.1} parent=1 // pred_region
      %339 = vsyncadd [#allocation4], 0
      %s340 = sshll.u32 [#allocation10], 4
      %s341 = int_to_ptr.vmem [resolvable:$true] %s340
      %s342 = sshll.u32 %s4, 4
      %s343 = int_to_ptr.hbm [resolvable:$true] %s342
      %348 = dma.vmem_to_hbm [thread:$0]  %s341, 128, %s343, [#allocation4], 64, 64, 4
    $region37: #{tpu_custom_call.1} parent=1 // pred_fallthru
      _
    // Predicated region
    $region38: #{tpu_custom_call.1} parent=1 // pred_check
      _
    $region39: #{tpu_custom_call.1} parent=1 // pred_check_branch
      %350 = sbr.rel (0) target = $region41
    $region40: #{tpu_custom_call.1} parent=1 // pred_region
      %352 = dma.done [#allocation4], 128
    $region41: #{tpu_custom_call.1} parent=1 // pred_fallthru
      _
    %353 = vsyncpa [#allocation3], 1
    %354 = vsyncpa [#allocation6], 1
    %355 = vsyncpa [#allocation9], 1
    %356 = vsyncpa [#allocation4], 1

</llo_original>
